<compile_context>
chip_gen: v7x
topology: tpu7x:2x2x1
jax: 0.10.0
libtpu: 0.0.40
codegen_flags: <defaults>
</compile_context>

<pallas_src>
import functools

import jax
import jax.numpy as jnp
from jax import lax
from jax.experimental import pallas as pl
from jax.experimental.pallas import tpu as pltpu

_EPS = 1e-8                       # torch cosine_similarity default eps
_LANE = 128
_CHUNK_ELEMS = 16384              # per row-chunk element budget (~16 f32 vregs/input)
_MIB = 1024 * 1024


def _cdiv(a, b):
    return -(-a // b)


def _round_up(x, m):
    return _cdiv(x, m) * m


@functools.lru_cache(maxsize=None)
def _tpu_limits():
    """Best effort (VMEM bytes per core, #TensorCores behind one device)."""
    vmem = 64 * _MIB              # conservative default (v7x-sized VMEM)
    cores = 1
    try:
        info = pltpu.get_tpu_info()
        v = getattr(info, "vmem_capacity_bytes", None)
        if v:
            vmem = int(v)
        for name in ("num_cores", "core_count", "num_tensorcores",
                     "tensorcore_count"):
            c = getattr(info, name, None)
            if c:
                cores = max(cores, int(c))
                break
    except Exception:
        pass
    try:
        kind = jax.devices()[0].device_kind.lower()
        if any(t in kind for t in ("v4", "v5p", "v7", "7x")):
            cores = max(cores, 2)  # megacore: 2 TensorCores share one device
    except Exception:
        pass
    return vmem, cores


def _budgets():
    """(per-input block byte target, vmem_limit_bytes, n_cores)."""
    vmem, cores = _tpu_limits()
    # 2 inputs x 2 pipeline buffers x block_target <= ~0.6 * VMEM, capped at
    # 6 MiB per input block (diminishing returns past that).
    block_target = int(min(6 * _MIB, max(_MIB, (vmem * 3) // 20)))
    vmem_limit = int(min((vmem * 3) // 4, 4 * block_target + 16 * _MIB))
    return block_target, vmem_limit, cores


def _native_rows(itemsize):
    # Sublane rows of one packed vreg tile: f32 -> 8, bf16 -> 16, int8 -> 32.
    return max(8, 32 // int(itemsize))


def _choose_fold(b, d, sub, n_cores):
    """Pick a divisor f of d for the free reshape (b, d) -> (b*f, d//f)."""
    col_cap = max(_LANE, _CHUNK_ELEMS // sub)
    min_rows = sub * (2 if n_cores >= 2 else 1)
    divisors = set()
    f = 1
    while f * f <= d:
        if d % f == 0:
            divisors.add(f)
            divisors.add(d // f)
        f += 1
    best_f, best_score = 1, -1
    for f in sorted(divisors):
        cols = d // f
        rows = b * f
        score = 0
        if cols <= col_cap and (cols >= _LANE or cols == d):
            score += 1000                  # fits the single-lane-block tall path
        if cols >= _LANE:
            score += 200                   # dense lanes
            if cols % _LANE == 0:
                score += 400               # unmasked, fully packed lane tiles
            if rows >= min_rows:
                score += 50                # fills sublanes / >= 2 row tiles
        if score > best_score:             # ties -> smallest f (largest cols)
            best_f, best_score = f, score
    return best_f, col_cap


# ------------------------------ tall path -----------------------------------
# One block covers the full (folded) feature dim; grid iterates row tiles only.

def _make_tall_kernel(row_chunk, n_chunks):
    def _sums(o_ref, rs, x, y):
        o_ref[rs, 0:1] = jnp.sum(x * y, axis=1, keepdims=True)
        o_ref[rs, 1:2] = jnp.sum(x * x, axis=1, keepdims=True)
        o_ref[rs, 2:3] = jnp.sum(y * y, axis=1, keepdims=True)

    def kernel(x_ref, y_ref, o_ref):
        if n_chunks == 1:
            _sums(o_ref, slice(None),
                  x_ref[...].astype(jnp.float32),
                  y_ref[...].astype(jnp.float32))
        elif n_chunks <= 8:
            # Few chunks: static starts, fully unrolled.
            for c in range(n_chunks):
                rs = pl.ds(c * row_chunk, row_chunk)
                _sums(o_ref, rs,
                      x_ref[rs, :].astype(jnp.float32),
                      y_ref[rs, :].astype(jnp.float32))
        else:
            # Many chunks: vreg-sized row chunks bound live ranges / temporaries.
            def body(c, carry):
                r0 = pl.multiple_of(c * row_chunk, row_chunk)
                rs = pl.ds(r0, row_chunk)
                _sums(o_ref, rs,
                      x_ref[rs, :].astype(jnp.float32),
                      y_ref[rs, :].astype(jnp.float32))
                return carry
            lax.fori_loop(0, n_chunks, body, 0)

    return kernel


def _tall_call(x, y, rows, cols, sub, itemsize, block_target, vmem_limit,
               n_cores):
    cols_pad = _round_up(cols, _LANE)          # VMEM lane padding
    if rows <= sub:
        block_rows = rows
    else:
        budget_rows = max(sub, block_target // (cols_pad * itemsize))
        cap = (rows // sub) * sub
        if n_cores >= 2 and rows >= 2 * sub:
            # Guarantee >= 2 row tiles so both TensorCores stream data (v7x).
            cap = min(cap, _round_up(_cdiv(rows, 2), sub))
        block_rows = max(sub, min((budget_rows // sub) * sub, cap))
    n_chunks = max(1, block_rows // sub)
    kernel = _make_tall_kernel(sub, n_chunks)

    grid = (_cdiv(rows, block_rows),)
    cost = pl.CostEstimate(
        flops=6 * rows * cols, transcendentals=0,
        bytes_accessed=rows * cols * 2 * itemsize + rows * 3 * 4)
    return pl.pallas_call(
        kernel,
        out_shape=jax.ShapeDtypeStruct((rows, 3), jnp.float32),
        grid_spec=pltpu.PrefetchScalarGridSpec(
            num_scalar_prefetch=0,
            grid=grid,
            in_specs=[pl.BlockSpec((block_rows, cols), lambda i: (i, 0)),
                      pl.BlockSpec((block_rows, cols), lambda i: (i, 0))],
            out_specs=pl.BlockSpec((block_rows, 3), lambda i: (i, 0)),
        ),
        compiler_params=pltpu.CompilerParams(
            dimension_semantics=("parallel",),
            vmem_limit_bytes=vmem_limit),
        cost_estimate=cost,
    )(x, y)


# ------------------------------ wide fallback --------------------------------
# Only used when D has no divisor giving a small-enough lane extent (e.g. large
# primes): lane-tiled reduction grid, tail mask only on the last k block.

def _make_wide_kernel(tk, nk, last_valid):
    ragged = last_valid != tk

    def kernel(x_ref, y_ref, o_ref, dot_sc, xx_sc, yy_sc):
        k = pl.program_id(1)

        @pl.when(k == 0)
        def _():
            dot_sc[...] = jnp.zeros_like(dot_sc)
            xx_sc[...] = jnp.zeros_like(xx_sc)
            yy_sc[...] = jnp.zeros_like(yy_sc)

        def accum(valid_cols):
            x = x_ref[...].astype(jnp.float32)
            y = y_ref[...].astype(jnp.float32)
            if valid_cols is not None:
                # Lane-only iota mask; emitted only for the last k block.
                keep = lax.broadcasted_iota(jnp.int32, (1, tk), 1) < valid_cols
                x = jnp.where(keep, x, 0.0)
                y = jnp.where(keep, y, 0.0)
            dot_sc[...] += jnp.sum(x * y, axis=1, keepdims=True)
            xx_sc[...] += jnp.sum(x * x, axis=1, keepdims=True)
            yy_sc[...] += jnp.sum(y * y, axis=1, keepdims=True)

        if not ragged:
            accum(None)
        else:
            @pl.when(k < nk - 1)
            def _():
                accum(None)

            @pl.when(k == nk - 1)
            def _():
                accum(last_valid)

        @pl.when(k == nk - 1)
        def _():
            o_ref[:, 0:1] = dot_sc[...]
            o_ref[:, 1:2] = xx_sc[...]
            o_ref[:, 2:3] = yy_sc[...]

    return kernel


def _wide_call(x, y, rows, cols, sub, itemsize, block_target, vmem_limit,
               n_cores):
    tr = rows if rows < sub else sub
    # Whole-block elementwise ops materialise f32 temporaries in this fallback,
    # so keep its blocks modest.
    wide_target = min(block_target, 2 * _MIB)
    tk = max(_LANE, (wide_target // (max(tr, 8) * itemsize)) // _LANE * _LANE)
    if tk >= cols:
        tk = cols
    nk = _cdiv(cols, tk)
    last_valid = cols - (nk - 1) * tk
    kernel = _make_wide_kernel(tk, nk, last_valid)

    grid = (_cdiv(rows, tr), nk)
    cost = pl.CostEstimate(
        flops=6 * rows * cols, transcendentals=0,
        bytes_accessed=rows * cols * 2 * itemsize + rows * 3 * 4)
    return pl.pallas_call(
        kernel,
        out_shape=jax.ShapeDtypeStruct((rows, 3), jnp.float32),
        grid_spec=pltpu.PrefetchScalarGridSpec(
            num_scalar_prefetch=0,
            grid=grid,
            in_specs=[pl.BlockSpec((tr, tk), lambda i, k: (i, k)),
                      pl.BlockSpec((tr, tk), lambda i, k: (i, k))],
            out_specs=pl.BlockSpec((tr, 3), lambda i, k: (i, 0)),
            scratch_shapes=[pltpu.VMEM((tr, 1), jnp.float32),
                            pltpu.VMEM((tr, 1), jnp.float32),
                            pltpu.VMEM((tr, 1), jnp.float32)],
        ),
        compiler_params=pltpu.CompilerParams(
            dimension_semantics=("parallel", "arbitrary"),
            vmem_limit_bytes=vmem_limit),
        cost_estimate=cost,
    )(x, y)


# --------------------------------- wrapper -----------------------------------

@jax.jit
def cosine_similarity(i_fm1, i_fm2):
    """Pallas equivalent of CosineSimilarity.forward(i_fm1, i_fm2) -> (B,)."""
    assert i_fm1.shape == i_fm2.shape and i_fm1.ndim >= 2
    b = i_fm1.shape[0]
    d = 1
    for s in i_fm1.shape[1:]:
        d *= s

    itemsize = max(jnp.dtype(i_fm1.dtype).itemsize,
                   jnp.dtype(i_fm2.dtype).itemsize)
    sub = _native_rows(itemsize)
    block_target, vmem_limit, n_cores = _budgets()

    # Fold the flattened features into extra rows (free row-major reshape of
    # contiguous data): fills vreg sublanes and makes one block cover the lanes.
    f, col_cap = _choose_fold(b, d, sub, n_cores)
    rows, cols = b * f, d // f
    x = i_fm1.reshape(rows, cols)
    y = i_fm2.reshape(rows, cols)

    if cols <= col_cap:
        parts = _tall_call(x, y, rows, cols, sub, itemsize, block_target,
                           vmem_limit, n_cores)
    else:
        parts = _wide_call(x, y, rows, cols, sub, itemsize, block_target,
                           vmem_limit, n_cores)

    # Combine fold partials and finalize (O(B*f) work, plain JAX).
    sums = parts.reshape(b, f, 3).sum(axis=1)
    eps = jnp.float32(_EPS)
    # torch.cosine_similarity: dot / (max(||x1||, eps) * max(||x2||, eps))
    n1 = jnp.maximum(jnp.sqrt(sums[:, 1]), eps)
    n2 = jnp.maximum(jnp.sqrt(sums[:, 2]), eps)
    cos = sums[:, 0] / (n1 * n2)

    out_dtype = jnp.promote_types(i_fm1.dtype, i_fm2.dtype)
    if not jnp.issubdtype(out_dtype, jnp.floating):
        out_dtype = jnp.float32
    return cos.astype(out_dtype)


def _reference(a, b_):
    xr = a.reshape(a.shape[0], -1).astype(jnp.float32)
    yr = b_.reshape(b_.shape[0], -1).astype(jnp.float32)
    n1 = jnp.maximum(jnp.linalg.norm(xr, axis=1), _EPS)
    n2 = jnp.maximum(jnp.linalg.norm(yr, axis=1), _EPS)
    return jnp.sum(xr * yr, axis=1) / (n1 * n2)


if __name__ == "__main__":
    key = jax.random.PRNGKey(0)
    k1, k2, k3, k4, k5, k6 = jax.random.split(key, 6)

    # Case 1: the spec's NCHW shape (tall path, lane width multiple of 128).
    b, c, h, w = 2, 4, 16, 16
    i_fm1 = jax.random.normal(k1, (b, c, h, w), dtype=jnp.float32)
    i_fm2 = jax.random.normal(k2, (b, c, h, w), dtype=jnp.float32)
    out = jax.block_until_ready(cosine_similarity(i_fm1, i_fm2))
    ref = _reference(i_fm1, i_fm2)
    assert out.shape == (b,), out.shape
    assert jnp.allclose(out, ref, atol=1e-5, rtol=1e-5), (out, ref)

    # Case 2: D = 1000 (tall path, ragged lane width + partial last row tile).
    j1 = jax.random.normal(k3, (3, 5, 10, 20), dtype=jnp.float32)
    j2 = jax.random.normal(k4, (3, 5, 10, 20), dtype=jnp.float32)
    out2 = jax.block_until_ready(cosine_similarity(j1, j2))
    ref2 = _reference(j1, j2)
    assert out2.shape == (3,), out2.shape
    assert jnp.allclose(out2, ref2, atol=1e-5, rtol=1e-5), (out2, ref2)

    # Case 3: D = 65537 (prime -> wide fallback: multi-k reduction + last-block
    # tail mask), exercised so both code paths are validated on hardware.
    p1 = jax.random.normal(k5, (16, 65537, 1, 1), dtype=jnp.float32)
    p2 = jax.random.normal(k6, (16, 65537, 1, 1), dtype=jnp.float32)
    out3 = jax.block_until_ready(cosine_similarity(p1, p2))
    ref3 = _reference(p1, p2)
    assert out3.shape == (16,), out3.shape
    assert jnp.allclose(out3, ref3, atol=1e-5, rtol=1e-5), (out3, ref3)

    print("KERNEL_OK")
</pallas_src>

<mosaic_0001>
module attributes {stable_mosaic.version = 11 : i64} {
  func.func @kernel(%arg0: i32, %arg1: memref<8x256xf32, #tpu.memory_space<vmem>>, %arg2: memref<8x256xf32, #tpu.memory_space<vmem>>, %arg3: memref<8x3xf32, #tpu.memory_space<vmem>>) attributes {dimension_semantics = [#tpu.dimension_semantics<parallel>], iteration_bounds = array<i64: 1>, scalar_prefetch = 0 : i64, scratch_operands = 0 : i64, tpu.core_type = #tpu.core_type<tc>, window_params = [{transform_indices = @transform_0, window_bounds = array<i64: 8, 256>}, {transform_indices = @transform_1, window_bounds = array<i64: 8, 256>}, {transform_indices = @transform_2, window_bounds = array<i64: 8, 3>}]} {
    %c0 = arith.constant 0 : index
    %c0_0 = arith.constant 0 : index
    %0 = vector.load %arg1[%c0, %c0_0] : memref<8x256xf32, #tpu.memory_space<vmem>>, vector<8x256xf32>
    %c0_1 = arith.constant 0 : index
    %c0_2 = arith.constant 0 : index
    %1 = vector.load %arg2[%c0_1, %c0_2] : memref<8x256xf32, #tpu.memory_space<vmem>>, vector<8x256xf32>
    %2 = arith.mulf %0, %1 : vector<8x256xf32>
    %cst = arith.constant dense<0.000000e+00> : vector<8xf32>
    %3 = vector.multi_reduction <add>, %2, %cst [1] : vector<8x256xf32> to vector<8xf32>
    %4 = vector.shape_cast %3 : vector<8xf32> to vector<8x1xf32>
    %c0_3 = arith.constant 0 : index
    %c0_4 = arith.constant 0 : index
    %5 = vector.load %arg3[%c0_3, %c0_4] : memref<8x3xf32, #tpu.memory_space<vmem>>, vector<8x1xf32>
    tpu.vector_store %arg3[%c0_3, %c0_4], %4 {strides = array<i32>} : memref<8x3xf32, #tpu.memory_space<vmem>>, vector<8x1xf32>,
    %6 = arith.mulf %0, %0 : vector<8x256xf32>
    %cst_5 = arith.constant dense<0.000000e+00> : vector<8xf32>
    %7 = vector.multi_reduction <add>, %6, %cst_5 [1] : vector<8x256xf32> to vector<8xf32>
    %8 = vector.shape_cast %7 : vector<8xf32> to vector<8x1xf32>
    %c0_6 = arith.constant 0 : index
    %c1 = arith.constant 1 : index
    %9 = vector.load %arg3[%c0_6, %c1] : memref<8x3xf32, #tpu.memory_space<vmem>>, vector<8x1xf32>
    tpu.vector_store %arg3[%c0_6, %c1], %8 {strides = array<i32>} : memref<8x3xf32, #tpu.memory_space<vmem>>, vector<8x1xf32>,
    %10 = arith.mulf %1, %1 : vector<8x256xf32>
    %cst_7 = arith.constant dense<0.000000e+00> : vector<8xf32>
    %11 = vector.multi_reduction <add>, %10, %cst_7 [1] : vector<8x256xf32> to vector<8xf32>
    %12 = vector.shape_cast %11 : vector<8xf32> to vector<8x1xf32>
    %c0_8 = arith.constant 0 : index
    %c2 = arith.constant 2 : index
    %13 = vector.load %arg3[%c0_8, %c2] : memref<8x3xf32, #tpu.memory_space<vmem>>, vector<8x1xf32>
    tpu.vector_store %arg3[%c0_8, %c2], %12 {strides = array<i32>} : memref<8x3xf32, #tpu.memory_space<vmem>>, vector<8x1xf32>,
    return
  }
  func.func @transform_0(%arg0: i32) -> (i32, i32) {
    %c0_i32 = arith.constant 0 : i32
    %c0_i32_0 = arith.constant 0 : i32
    return %arg0, %c0_i32 : i32, i32
  }
  func.func @transform_1(%arg0: i32) -> (i32, i32) {
    %c0_i32 = arith.constant 0 : i32
    %c0_i32_0 = arith.constant 0 : i32
    return %arg0, %c0_i32 : i32, i32
  }
  func.func @transform_2(%arg0: i32) -> (i32, i32) {
    %c0_i32 = arith.constant 0 : i32
    %c0_i32_0 = arith.constant 0 : i32
    return %arg0, %c0_i32 : i32, i32
  }
}

</mosaic_0001>

<llo_original>
// kernel: cosine_similarity.1
$region0: #{cosine_similarity.1}
  #allocation0 [shape = 'u32[]', space=smem, size = 0x4, offset = 0x4, fixed_abs, tag = 'smem constant byte address 0x4 - core index']
  #allocation1 [shape = 'u32[144,128]{1,0:T(1,128)}', space=vmem, size = 0x12000, scoped, tag = 'internal scratch']
  %s0 = inlined_call_operand.vmem [shape: f32[8,256], index: 0, kind: input, shape index: {}]
  %s1 = inlined_call_operand.vmem [shape: f32[8,256], index: 1, kind: input, shape index: {}]
  %s2 = inlined_call_operand.vmem [shape: f32[8,3], index: 2, kind: output, shape index: {}]
  %s3 = sld [smem:[#allocation0]]
  $region18: #{cosine_similarity.1} parent=0
    _
  %s5 = ssub.s32 1, %s3
  %s6 = scalar_select 0, %s5, %s3
  // Predicated region
  $region2: #{cosine_similarity.1} parent=0 // pred_check
    _
  $region3: #{cosine_similarity.1} parent=0 // pred_check_branch
    %8 = sbr.rel (0) target = $region5
  $region4: #{cosine_similarity.1} parent=0 // pred_region
    _
  $region5: #{cosine_similarity.1} parent=0 // pred_fallthru
    _
  // Predicated region
  $region6: #{cosine_similarity.1} parent=0 // pred_check
    _
  $region7: #{cosine_similarity.1} parent=0 // pred_check_branch
    %10 = sbr.rel (0) target = $region9
  $region8: #{cosine_similarity.1} parent=0 // pred_region
    _
  $region9: #{cosine_similarity.1} parent=0 // pred_fallthru
    _
  %v11 = vld [vmem:[%s0] sm:$0xff]
  %v12 = vld [vmem:[%s0 + $0x8] sm:$0xff]
  %v13 = vld [vmem:[%s1] sm:$0xff]
  %v14 = vld [vmem:[%s1 + $0x8] sm:$0xff]
  %v15 = vmul.f32 %v11, %v13
  %v16 = vmul.f32 %v12, %v14
  %v17 = vadd.f32 %v15, %v16
  %18 = vadd.xlane.f32.xlu0 %v17
  %v19 = vpop.xlane.xlu0 %18
  %vm20 = vcmask 7168
  %21 = vst.msk [vmem:[%s2] sm:$0xff] %vm20, %v19
  %v22 = vmul.f32 %v11, %v11
  %v23 = vmul.f32 %v12, %v12
  %v24 = vadd.f32 %v22, %v23
  %25 = vadd.xlane.f32.xlu0 %v24
  %v26 = vpop.xlane.xlu0 %25
  %vm27 = vcmask 15368
  %28 = vst.msk [vmem:[%s2] sm:$0xff] %vm27, %v26
  %v29 = vmul.f32 %v13, %v13
  %v30 = vmul.f32 %v14, %v14
  %v31 = vadd.f32 %v29, %v30
  %32 = vadd.xlane.f32.xlu0 %v31
  %v33 = vpop.xlane.xlu0 %32
  %vm34 = vcmask 23568
  %35 = vst.msk [vmem:[%s2] sm:$0xff] %vm34, %v33
  // Predicated region
  $region10: #{cosine_similarity.1} parent=0 // pred_check
    _
  $region11: #{cosine_similarity.1} parent=0 // pred_check_branch
    %37 = sbr.rel (0) target = $region13
  $region12: #{cosine_similarity.1} parent=0 // pred_region
    _
  $region13: #{cosine_similarity.1} parent=0 // pred_fallthru
    _
  // Predicated region
  $region14: #{cosine_similarity.1} parent=0 // pred_check
    _
  $region15: #{cosine_similarity.1} parent=0 // pred_check_branch
    %39 = sbr.rel (0) target = $region17
  $region16: #{cosine_similarity.1} parent=0 // pred_region
    _
  $region17: #{cosine_similarity.1} parent=0 // pred_fallthru
    _

</llo_original>
